<compile_context>
chip_gen: v7x
topology: tpu7x:2x2x1
jax: 0.10.0
libtpu: 0.0.40
codegen_flags: <defaults>
</compile_context>

<pallas_src>
import math
import functools
from typing import NamedTuple

import jax
import jax.numpy as jnp
from jax.experimental import pallas as pl
from jax.experimental.pallas import tpu as pltpu

LN_EPS = 1e-5  # torch.nn.LayerNorm default


def _round_up(x: int, m: int) -> int:
    return ((x + m - 1) // m) * m


def _cdiv(a: int, b: int) -> int:
    return -(-a // b)


# ----------------------------------------------------------------------------
# Kernel
# ----------------------------------------------------------------------------
def _adapter_kernel(x_ref, a_ref, acs_ref, hb_ref, b_ref, pg_ref, pb_ref, o_ref, *,
                    use_pre_ln: bool, use_post_ln: bool, use_act: bool,
                    n_in: int, n_out: int):
    x = x_ref[...]                                     # (tm, in), model dtype
    cdt = x.dtype

    # adapter_A on the raw (un-normalized) x; pre-LN is folded in afterwards.
    h = jnp.dot(x, a_ref[...], preferred_element_type=jnp.float32)   # (tm, r_pad) f32

    if use_pre_ln:
        xf = x.astype(jnp.float32)
        s1 = jnp.sum(xf, axis=-1, keepdims=True)
        s2 = jnp.sum(xf * xf, axis=-1, keepdims=True)
        mu = s1 * (1.0 / n_in)
        var = s2 * (1.0 / n_in) - mu * mu
        rsig = jax.lax.rsqrt(var + LN_EPS)
        # ((x - mu) * rsig) @ A'  ==  rsig*(x @ A') - (rsig*mu)*colsum(A')
        # (gamma already folded into A'; beta@A^T is hb_ref)
        h = rsig * h - (rsig * mu) * acs_ref[...] + hb_ref[...]

    if use_act:
        h = jnp.maximum(h, 0.0)                        # relu
    # TODO(synk): only relu from get_activation() is implemented; other
    # activation types (gelu, tanh, ...) would need their own branch here.

    # adapter_B
    y = jnp.dot(h.astype(cdt), b_ref[...], preferred_element_type=jnp.float32)

    if use_post_ln:
        s1 = jnp.sum(y, axis=-1, keepdims=True)
        s2 = jnp.sum(y * y, axis=-1, keepdims=True)
        mu = s1 * (1.0 / n_out)
        var = s2 * (1.0 / n_out) - mu * mu
        y = (y - mu) * jax.lax.rsqrt(var + LN_EPS)
        y = y * pg_ref[...] + pb_ref[...]

    o_ref[...] = y.astype(o_ref.dtype)


# ----------------------------------------------------------------------------
# One-time parameter preparation (hoisted out of the per-call path)
# ----------------------------------------------------------------------------
class AdapterParams(NamedTuple):
    a_eff: jax.Array      # (in, r_pad)  model dtype, pre-LN gamma folded in
    a_colsum: jax.Array   # (1, r_pad)   f32, column sums of a_eff
    h_bias: jax.Array     # (1, r_pad)   f32, pre-LN beta @ A^T
    b_eff: jax.Array      # (r_pad, out) model dtype
    post_gamma: jax.Array  # (1, out)    f32
    post_beta: jax.Array   # (1, out)    f32
    in_features: int
    out_features: int
    r: int
    use_pre_ln: bool
    use_post_ln: bool


def prepare_adapter_params(a_w, b_w, *, pre_gamma=None, pre_beta=None,
                           post_gamma=None, post_beta=None, compute_dtype=None):
    """a_w: (r, in); b_w: (out, r) in PyTorch nn.Linear layout. Call once."""
    r, in_features = a_w.shape
    out_features, r2 = b_w.shape
    assert r2 == r
    use_pre_ln = pre_gamma is not None
    use_post_ln = post_gamma is not None
    if compute_dtype is None:
        compute_dtype = a_w.dtype

    # Pad only the tiny adapter rank to a lane-dense width (weights only; no
    # per-call activation padding). Done once, negligible HBM/VMEM cost.
    r_pad = _round_up(r, 128)

    a_t = a_w.astype(jnp.float32).T                                  # (in, r)
    if use_pre_ln:
        a_eff = a_t * pre_gamma.astype(jnp.float32).reshape(-1, 1)   # gamma fold
        h_bias = pre_beta.astype(jnp.float32).reshape(1, -1) @ a_t   # (1, r)
    else:
        a_eff = a_t
        h_bias = jnp.zeros((1, r), jnp.float32)
    a_colsum = jnp.sum(a_eff, axis=0, keepdims=True)                 # (1, r)
    b_t = b_w.astype(jnp.float32).T                                  # (r, out)

    a_eff_p = jnp.pad(a_eff, ((0, 0), (0, r_pad - r))).astype(compute_dtype)
    a_colsum_p = jnp.pad(a_colsum, ((0, 0), (0, r_pad - r)))
    h_bias_p = jnp.pad(h_bias, ((0, 0), (0, r_pad - r)))
    b_eff_p = jnp.pad(b_t, ((0, r_pad - r), (0, 0))).astype(compute_dtype)

    if use_post_ln:
        pg = post_gamma.astype(jnp.float32).reshape(1, -1)
        pb = post_beta.astype(jnp.float32).reshape(1, -1)
    else:
        pg = jnp.ones((1, out_features), jnp.float32)
        pb = jnp.zeros((1, out_features), jnp.float32)

    return AdapterParams(a_eff_p, a_colsum_p, h_bias_p, b_eff_p, pg, pb,
                         in_features, out_features, r, use_pre_ln, use_post_ln)


# ----------------------------------------------------------------------------
# Tiling / VMEM policy
# ----------------------------------------------------------------------------
def _pick_tiling(rows, in_features, out_features, r_pad, itemsize, use_pre_ln):
    # Generation-aware VMEM: v7x has 64 MiB/TC, v5e/v6e 128 MiB.
    try:
        vmem_cap = int(pltpu.get_tpu_info().vmem_capacity_bytes)
    except Exception:
        vmem_cap = 64 << 20
    vmem_limit = max(32 << 20, min(vmem_cap // 2, 64 << 20))  # 32 MiB v7x, 64 MiB v5e/v6e
    budget = vmem_limit - (6 << 20)                           # Mosaic internal scratch headroom

    # Every input is double-buffered by the Pallas pipeline -> weights count 2x.
    weight_bytes = 2 * ((in_features * r_pad + r_pad * out_features) * itemsize
                        + (2 * r_pad + 2 * out_features) * 4)
    # Per-row: double-buffered x/out tiles + f32 in-kernel intermediates
    # (h, y, and a conservative allowance for the pre-LN f32 stats pass).
    per_row = (2 * (in_features + out_features) * itemsize
               + 4 * (in_features * int(use_pre_ln) + r_pad + out_features))

    avail = budget - weight_bytes
    tm = max(avail // max(per_row, 1), 128)
    tm = (tm // 128) * 128                       # MXU-aligned on all generations
    tm_cap = 1024 if vmem_cap <= (64 << 20) else 2048
    tm = min(tm, tm_cap)
    tm = min(tm, _round_up(rows, 8))             # never exceed the problem
    tm = max(int(tm), 8)

    # Guarantee >=2 grid steps so both v7x TensorCores get work.
    if rows >= 512 and _cdiv(rows, tm) < 2:
        tm = min(tm, _round_up(_cdiv(rows, 2), 128))

    # Bound ragged-tail waste: keep the step count, shrink tm toward rows/steps.
    nsteps = _cdiv(rows, tm)
    if tm > 128:
        tm = min(tm, _round_up(_cdiv(rows, nsteps), 128))

    # Make sure the scoped limit covers what we will actually allocate.
    usage = weight_bytes + per_row * tm + (2 << 20)
    vmem_limit = min(max(vmem_limit, usage), max(vmem_cap - (8 << 20), 32 << 20))
    return tm, int(vmem_limit)


# ----------------------------------------------------------------------------
# Per-call path (no weight preprocessing, no activation padding / slicing)
# ----------------------------------------------------------------------------
def adapter_linear_apply(x, params: AdapterParams, *, use_act: bool = True):
    in_features = params.in_features
    out_features = params.out_features
    assert x.shape[-1] == in_features
    lead = x.shape[:-1]
    rows = int(math.prod(lead)) if lead else 1
    x2d = x.reshape(rows, in_features)          # no-copy for contiguous x
    dtype = x2d.dtype
    itemsize = jnp.dtype(dtype).itemsize
    r_pad = params.a_eff.shape[1]

    tm, vmem_limit = _pick_tiling(rows, in_features, out_features, r_pad,
                                  itemsize, params.use_pre_ln)
    grid = (_cdiv(rows, tm),)

    kernel = functools.partial(
        _adapter_kernel,
        use_pre_ln=params.use_pre_ln, use_post_ln=params.use_post_ln,
        use_act=use_act, n_in=in_features, n_out=out_features)

    cost = pl.CostEstimate(
        flops=2 * rows * params.r * (in_features + out_features),
        transcendentals=rows * (int(params.use_pre_ln) + int(params.use_post_ln)),
        bytes_accessed=(rows * (in_features + out_features) * itemsize
                        + (in_features * r_pad + r_pad * out_features) * itemsize),
    )

    out2d = pl.pallas_call(
        kernel,
        out_shape=jax.ShapeDtypeStruct((rows, out_features), dtype),
        grid_spec=pltpu.PrefetchScalarGridSpec(
            num_scalar_prefetch=0,
            grid=grid,
            in_specs=[
                pl.BlockSpec((tm, in_features), lambda i: (i, 0)),       # x row tile
                pl.BlockSpec((in_features, r_pad), lambda i: (0, 0)),    # A' (gamma folded)
                pl.BlockSpec((1, r_pad), lambda i: (0, 0)),              # colsum(A')
                pl.BlockSpec((1, r_pad), lambda i: (0, 0)),              # beta @ A^T
                pl.BlockSpec((r_pad, out_features), lambda i: (0, 0)),   # B'
                pl.BlockSpec((1, out_features), lambda i: (0, 0)),       # post gamma
                pl.BlockSpec((1, out_features), lambda i: (0, 0)),       # post beta
            ],
            out_specs=pl.BlockSpec((tm, out_features), lambda i: (i, 0)),
        ),
        compiler_params=pltpu.CompilerParams(
            dimension_semantics=("parallel",),
            vmem_limit_bytes=vmem_limit,
        ),
        cost_estimate=cost,
    )(x2d, params.a_eff, params.a_colsum, params.h_bias,
      params.b_eff, params.post_gamma, params.post_beta)

    return out2d.reshape(*lead, out_features)


def adapter_linear(x, a_w, b_w, *, pre_gamma=None, pre_beta=None,
                   post_gamma=None, post_beta=None, use_act=True):
    """Convenience wrapper (prep + apply). Prefer calling prepare once and
    reusing the params across invocations."""
    params = prepare_adapter_params(a_w, b_w, pre_gamma=pre_gamma, pre_beta=pre_beta,
                                    post_gamma=post_gamma, post_beta=post_beta,
                                    compute_dtype=x.dtype)
    return adapter_linear_apply(x, params, use_act=use_act)


# ----------------------------------------------------------------------------
# Reference + demo
# ----------------------------------------------------------------------------
def _reference(x, a_w, b_w, pre_gamma, pre_beta, post_gamma, post_beta,
               *, use_pre_ln, use_post_ln, use_act):
    x = x.astype(jnp.float32)
    if use_pre_ln:
        mu = jnp.mean(x, axis=-1, keepdims=True)
        var = jnp.mean((x - mu) ** 2, axis=-1, keepdims=True)
        x = (x - mu) * jax.lax.rsqrt(var + LN_EPS) * pre_gamma + pre_beta
    h = x @ a_w.astype(jnp.float32).T
    if use_act:
        h = jnp.maximum(h, 0.0)
    y = h @ b_w.astype(jnp.float32).T
    if use_post_ln:
        mu = jnp.mean(y, axis=-1, keepdims=True)
        var = jnp.mean((y - mu) ** 2, axis=-1, keepdims=True)
        y = (y - mu) * jax.lax.rsqrt(var + LN_EPS) * post_gamma + post_beta
    return y


if __name__ == "__main__":
    # Module config (synthetic, deterministic init — no checkpoint loading).
    in_features, out_features, r, alpha_r = 32, 32, 8, 16
    use_pre_ln, use_post_ln, use_act = True, True, True   # activation="relu"

    batch, seq = 2, 8
    key = jax.random.PRNGKey(0)
    kx, ka, kb, kg1, kb1, kg2, kb2 = jax.random.split(key, 7)

    x = jax.random.normal(kx, (batch, seq, in_features), dtype=jnp.float32)

    # kaiming_uniform_(a=sqrt(5)) => U(-1/sqrt(fan_in), 1/sqrt(fan_in))
    bound_a = 1.0 / math.sqrt(in_features)
    a_w = jax.random.uniform(ka, (r, in_features), jnp.float32, -bound_a, bound_a)
    bound_b = 1.0 / math.sqrt(r)
    b_w = jax.random.uniform(kb, (out_features, r), jnp.float32, -bound_b, bound_b)

    # LayerNorm affine params (perturbed from torch default 1/0 so the
    # gamma/beta folding path is actually exercised).
    pre_gamma = 1.0 + 0.1 * jax.random.normal(kg1, (in_features,), jnp.float32)
    pre_beta = 0.1 * jax.random.normal(kb1, (in_features,), jnp.float32)
    post_gamma = 1.0 + 0.1 * jax.random.normal(kg2, (out_features,), jnp.float32)
    post_beta = 0.1 * jax.random.normal(kb2, (out_features,), jnp.float32)

    # One-time weight preparation (hoisted out of the per-call path).
    params = prepare_adapter_params(
        a_w, b_w,
        pre_gamma=pre_gamma if use_pre_ln else None,
        pre_beta=pre_beta if use_pre_ln else None,
        post_gamma=post_gamma if use_post_ln else None,
        post_beta=post_beta if use_post_ln else None,
        compute_dtype=x.dtype)

    y = adapter_linear_apply(x, params, use_act=use_act)
    y = jax.block_until_ready(y)

    y_ref = _reference(x.reshape(-1, in_features), a_w, b_w,
                       pre_gamma, pre_beta, post_gamma, post_beta,
                       use_pre_ln=use_pre_ln, use_post_ln=use_post_ln,
                       use_act=use_act).reshape(batch, seq, out_features)

    assert y.shape == (batch, seq, out_features)
    assert jnp.allclose(y, y_ref, atol=1e-4, rtol=1e-4), \
        float(jnp.max(jnp.abs(y - y_ref)))
    print("KERNEL_OK")
</pallas_src>

<mosaic_0001>
module attributes {stable_mosaic.version = 11 : i64} {
  func.func @_adapter_kernel(%arg0: i32, %arg1: memref<16x32xf32, #tpu.memory_space<vmem>>, %arg2: memref<32x128xf32, #tpu.memory_space<vmem>>, %arg3: memref<1x128xf32, #tpu.memory_space<vmem>>, %arg4: memref<1x128xf32, #tpu.memory_space<vmem>>, %arg5: memref<128x32xf32, #tpu.memory_space<vmem>>, %arg6: memref<1x32xf32, #tpu.memory_space<vmem>>, %arg7: memref<1x32xf32, #tpu.memory_space<vmem>>, %arg8: memref<16x32xf32, #tpu.memory_space<vmem>>) attributes {dimension_semantics = [#tpu.dimension_semantics<parallel>], iteration_bounds = array<i64: 1>, scalar_prefetch = 0 : i64, scratch_operands = 0 : i64, tpu.core_type = #tpu.core_type<tc>, window_params = [{transform_indices = @transform_0, window_bounds = array<i64: 16, 32>}, {pipeline_mode = #tpu.pipeline_mode<synchronous>, transform_indices = @transform_1, window_bounds = array<i64: 32, 128>}, {pipeline_mode = #tpu.pipeline_mode<synchronous>, transform_indices = @transform_2, window_bounds = array<i64: 1, 128>}, {pipeline_mode = #tpu.pipeline_mode<synchronous>, transform_indices = @transform_3, window_bounds = array<i64: 1, 128>}, {pipeline_mode = #tpu.pipeline_mode<synchronous>, transform_indices = @transform_4, window_bounds = array<i64: 128, 32>}, {pipeline_mode = #tpu.pipeline_mode<synchronous>, transform_indices = @transform_5, window_bounds = array<i64: 1, 32>}, {pipeline_mode = #tpu.pipeline_mode<synchronous>, transform_indices = @transform_6, window_bounds = array<i64: 1, 32>}, {transform_indices = @transform_7, window_bounds = array<i64: 16, 32>}]} {
    %c0 = arith.constant 0 : index
    %c0_0 = arith.constant 0 : index
    %0 = vector.load %arg1[%c0, %c0_0] : memref<16x32xf32, #tpu.memory_space<vmem>>, vector<16x32xf32>
    %c0_1 = arith.constant 0 : index
    %c0_2 = arith.constant 0 : index
    %1 = vector.load %arg2[%c0_1, %c0_2] : memref<32x128xf32, #tpu.memory_space<vmem>>, vector<32x128xf32>
    %cst = arith.constant dense<0.000000e+00> : vector<16x128xf32>
    %2 = tpu.matmul %0, %1, %cst {dimension_numbers = #tpu.dot_dimension_numbers<[1], [0], [0], [1], [0, 0, 1, 1], [], []>} : vector<16x32xf32>, vector<32x128xf32>, vector<16x128xf32> -> vector<16x128xf32>
    %cst_3 = arith.constant dense<0.000000e+00> : vector<16xf32>
    %3 = vector.multi_reduction <add>, %0, %cst_3 [1] : vector<16x32xf32> to vector<16xf32>
    %4 = vector.shape_cast %3 : vector<16xf32> to vector<16x1xf32>
    %5 = arith.mulf %0, %0 : vector<16x32xf32>
    %cst_4 = arith.constant dense<0.000000e+00> : vector<16xf32>
    %6 = vector.multi_reduction <add>, %5, %cst_4 [1] : vector<16x32xf32> to vector<16xf32>
    %7 = vector.shape_cast %6 : vector<16xf32> to vector<16x1xf32>
    %cst_5 = arith.constant 3.125000e-02 : f32
    %8 = vector.broadcast %cst_5 : f32 to vector<16x1xf32>
    %9 = arith.mulf %4, %8 : vector<16x1xf32>
    %cst_6 = arith.constant 3.125000e-02 : f32
    %10 = vector.broadcast %cst_6 : f32 to vector<16x1xf32>
    %11 = arith.mulf %7, %10 : vector<16x1xf32>
    %12 = arith.mulf %9, %9 : vector<16x1xf32>
    %13 = arith.subf %11, %12 : vector<16x1xf32>
    %cst_7 = arith.constant 9.99999974E-6 : f32
    %14 = vector.broadcast %cst_7 : f32 to vector<16x1xf32>
    %15 = arith.addf %13, %14 : vector<16x1xf32>
    %16 = math.rsqrt %15 : vector<16x1xf32>
    %17 = vector.broadcast %16 : vector<16x1xf32> to vector<16x128xf32>
    %18 = arith.mulf %17, %2 : vector<16x128xf32>
    %19 = arith.mulf %16, %9 : vector<16x1xf32>
    %c0_8 = arith.constant 0 : index
    %c0_9 = arith.constant 0 : index
    %20 = vector.load %arg3[%c0_8, %c0_9] : memref<1x128xf32, #tpu.memory_space<vmem>>, vector<1x128xf32>
    %21 = vector.broadcast %19 : vector<16x1xf32> to vector<16x128xf32>
    %22 = vector.broadcast %20 : vector<1x128xf32> to vector<16x128xf32>
    %23 = arith.mulf %21, %22 : vector<16x128xf32>
    %24 = arith.subf %18, %23 : vector<16x128xf32>
    %c0_10 = arith.constant 0 : index
    %c0_11 = arith.constant 0 : index
    %25 = vector.load %arg4[%c0_10, %c0_11] : memref<1x128xf32, #tpu.memory_space<vmem>>, vector<1x128xf32>
    %26 = vector.broadcast %25 : vector<1x128xf32> to vector<16x128xf32>
    %27 = arith.addf %24, %26 : vector<16x128xf32>
    %cst_12 = arith.constant 0.000000e+00 : f32
    %28 = vector.broadcast %cst_12 : f32 to vector<16x128xf32>
    %29 = arith.maximumf %27, %28 : vector<16x128xf32>
    %c0_13 = arith.constant 0 : index
    %c0_14 = arith.constant 0 : index
    %30 = vector.load %arg5[%c0_13, %c0_14] : memref<128x32xf32, #tpu.memory_space<vmem>>, vector<128x32xf32>
    %cst_15 = arith.constant dense<0.000000e+00> : vector<16x32xf32>
    %31 = tpu.matmul %29, %30, %cst_15 {dimension_numbers = #tpu.dot_dimension_numbers<[1], [0], [0], [1], [0, 0, 1, 1], [], []>} : vector<16x128xf32>, vector<128x32xf32>, vector<16x32xf32> -> vector<16x32xf32>
    %cst_16 = arith.constant dense<0.000000e+00> : vector<16xf32>
    %32 = vector.multi_reduction <add>, %31, %cst_16 [1] : vector<16x32xf32> to vector<16xf32>
    %33 = vector.shape_cast %32 : vector<16xf32> to vector<16x1xf32>
    %34 = arith.mulf %31, %31 : vector<16x32xf32>
    %cst_17 = arith.constant dense<0.000000e+00> : vector<16xf32>
    %35 = vector.multi_reduction <add>, %34, %cst_17 [1] : vector<16x32xf32> to vector<16xf32>
    %36 = vector.shape_cast %35 : vector<16xf32> to vector<16x1xf32>
    %cst_18 = arith.constant 3.125000e-02 : f32
    %37 = vector.broadcast %cst_18 : f32 to vector<16x1xf32>
    %38 = arith.mulf %33, %37 : vector<16x1xf32>
    %cst_19 = arith.constant 3.125000e-02 : f32
    %39 = vector.broadcast %cst_19 : f32 to vector<16x1xf32>
    %40 = arith.mulf %36, %39 : vector<16x1xf32>
    %41 = arith.mulf %38, %38 : vector<16x1xf32>
    %42 = arith.subf %40, %41 : vector<16x1xf32>
    %43 = vector.broadcast %38 : vector<16x1xf32> to vector<16x32xf32>
    %44 = arith.subf %31, %43 : vector<16x32xf32>
    %cst_20 = arith.constant 9.99999974E-6 : f32
    %45 = vector.broadcast %cst_20 : f32 to vector<16x1xf32>
    %46 = arith.addf %42, %45 : vector<16x1xf32>
    %47 = math.rsqrt %46 : vector<16x1xf32>
    %48 = vector.broadcast %47 : vector<16x1xf32> to vector<16x32xf32>
    %49 = arith.mulf %44, %48 : vector<16x32xf32>
    %c0_21 = arith.constant 0 : index
    %c0_22 = arith.constant 0 : index
    %50 = vector.load %arg6[%c0_21, %c0_22] : memref<1x32xf32, #tpu.memory_space<vmem>>, vector<1x32xf32>
    %51 = vector.broadcast %50 : vector<1x32xf32> to vector<16x32xf32>
    %52 = arith.mulf %49, %51 : vector<16x32xf32>
    %c0_23 = arith.constant 0 : index
    %c0_24 = arith.constant 0 : index
    %53 = vector.load %arg7[%c0_23, %c0_24] : memref<1x32xf32, #tpu.memory_space<vmem>>, vector<1x32xf32>
    %54 = vector.broadcast %53 : vector<1x32xf32> to vector<16x32xf32>
    %55 = arith.addf %52, %54 : vector<16x32xf32>
    %c0_25 = arith.constant 0 : index
    %c0_26 = arith.constant 0 : index
    %56 = vector.load %arg8[%c0_25, %c0_26] : memref<16x32xf32, #tpu.memory_space<vmem>>, vector<16x32xf32>
    tpu.vector_store %arg8[%c0_25, %c0_26], %55 {strides = array<i32>} : memref<16x32xf32, #tpu.memory_space<vmem>>, vector<16x32xf32>,
    return
  }
  func.func @transform_0(%arg0: i32) -> (i32, i32) {
    %c0_i32 = arith.constant 0 : i32
    %c0_i32_0 = arith.constant 0 : i32
    return %arg0, %c0_i32 : i32, i32
  }
  func.func @transform_1(%arg0: i32) -> (i32, i32) {
    %c0_i32 = arith.constant 0 : i32
    %c0_i32_0 = arith.constant 0 : i32
    %c0_i32_1 = arith.constant 0 : i32
    return %c0_i32, %c0_i32_0 : i32, i32
  }
  func.func @transform_2(%arg0: i32) -> (i32, i32) {
    %c0_i32 = arith.constant 0 : i32
    %c0_i32_0 = arith.constant 0 : i32
    %c0_i32_1 = arith.constant 0 : i32
    return %c0_i32, %c0_i32_0 : i32, i32
  }
  func.func @transform_3(%arg0: i32) -> (i32, i32) {
    %c0_i32 = arith.constant 0 : i32
    %c0_i32_0 = arith.constant 0 : i32
    %c0_i32_1 = arith.constant 0 : i32
    return %c0_i32, %c0_i32_0 : i32, i32
  }
  func.func @transform_4(%arg0: i32) -> (i32, i32) {
    %c0_i32 = arith.constant 0 : i32
    %c0_i32_0 = arith.constant 0 : i32
    %c0_i32_1 = arith.constant 0 : i32
    return %c0_i32, %c0_i32_0 : i32, i32
  }
  func.func @transform_5(%arg0: i32) -> (i32, i32) {
    %c0_i32 = arith.constant 0 : i32
    %c0_i32_0 = arith.constant 0 : i32
    %c0_i32_1 = arith.constant 0 : i32
    return %c0_i32, %c0_i32_0 : i32, i32
  }
  func.func @transform_6(%arg0: i32) -> (i32, i32) {
    %c0_i32 = arith.constant 0 : i32
    %c0_i32_0 = arith.constant 0 : i32
    %c0_i32_1 = arith.constant 0 : i32
    return %c0_i32, %c0_i32_0 : i32, i32
  }
  func.func @transform_7(%arg0: i32) -> (i32, i32) {
    %c0_i32 = arith.constant 0 : i32
    %c0_i32_0 = arith.constant 0 : i32
    return %arg0, %c0_i32 : i32, i32
  }
}

</mosaic_0001>

<llo_original>
// kernel: tpu_custom_call.1
$region0: #{tpu_custom_call.1}
  #allocation0 [shape = 'u32[]', space=smem, size = 0x4, offset = 0x4, fixed_abs, tag = 'smem constant byte address 0x4 - core index']
  #allocation1 [shape = 'u32[144,128]{1,0:T(1,128)}', space=vmem, size = 0x12000, scoped, tag = 'internal scratch']
  %s0 = inlined_call_operand.vmem [shape: f32[16,32], index: 0, kind: input, shape index: {}]
  %s1 = inlined_call_operand.vmem [shape: f32[32,128], index: 1, kind: input, shape index: {}]
  %s2 = inlined_call_operand.vmem [shape: f32[1,128], index: 2, kind: input, shape index: {}]
  %s3 = inlined_call_operand.vmem [shape: f32[1,128], index: 3, kind: input, shape index: {}]
  %s4 = inlined_call_operand.vmem [shape: f32[128,32], index: 4, kind: input, shape index: {}]
  %s5 = inlined_call_operand.vmem [shape: f32[1,32], index: 5, kind: input, shape index: {}]
  %s6 = inlined_call_operand.vmem [shape: f32[1,32], index: 6, kind: input, shape index: {}]
  %s7 = inlined_call_operand.hbm [shape: f32[16,32], index: 7, kind: output, shape index: {}]
  %s8 = sld [smem:[#allocation0]]
  $region38: #{tpu_custom_call.1} parent=0
    _
  %s10 = ssub.s32 1, %s8
  %s11 = scalar_select 0, %s10, %s8
  $region1: #{tpu_custom_call.1} parent=0
    #allocation2 [shape = 'u8[8192]{0}', space=vmem, size = 0x2000, scoped, tag = 'output window, operand 0, single buffered']
    #allocation3 [shape = 's32[1]{0}', space=sflag, size = 0x4, scoped, tag = 'scoped memory for tpu_custom_call.1']
    %12 = vsyncpa [#allocation3], 0
    // Predicated region
    $region2: #{tpu_custom_call.1} parent=1 // pred_check
      _
    $region3: #{tpu_custom_call.1} parent=1 // pred_check_branch
      %14 = sbr.rel (0) target = $region5
    $region4: #{tpu_custom_call.1} parent=1 // pred_region
      _
    $region5: #{tpu_custom_call.1} parent=1 // pred_fallthru
      _
    // Predicated region
    $region6: #{tpu_custom_call.1} parent=1 // pred_check
      _
    $region7: #{tpu_custom_call.1} parent=1 // pred_check_branch
      %16 = sbr.rel (0) target = $region9
    $region8: #{tpu_custom_call.1} parent=1 // pred_region
      _
    $region9: #{tpu_custom_call.1} parent=1 // pred_fallthru
      _
    // Predicated region
    $region10: #{tpu_custom_call.1} parent=1 // pred_check
      _
    $region11: #{tpu_custom_call.1} parent=1 // pred_check_branch
      %18 = sbr.rel (0) target = $region13
    $region12: #{tpu_custom_call.1} parent=1 // pred_region
      _
    $region13: #{tpu_custom_call.1} parent=1 // pred_fallthru
      _
    // Predicated region
    $region14: #{tpu_custom_call.1} parent=1 // pred_check
      _
    $region15: #{tpu_custom_call.1} parent=1 // pred_check_branch
      %20 = sbr.rel (0) target = $region17
    $region16: #{tpu_custom_call.1} parent=1 // pred_region
      _
    $region17: #{tpu_custom_call.1} parent=1 // pred_fallthru
      _
    // Predicated region
    $region18: #{tpu_custom_call.1} parent=1 // pred_check
      _
    $region19: #{tpu_custom_call.1} parent=1 // pred_check_branch
      %22 = sbr.rel (0) target = $region21
    $region20: #{tpu_custom_call.1} parent=1 // pred_region
      _
    $region21: #{tpu_custom_call.1} parent=1 // pred_fallthru
      _
    // Predicated region
    $region22: #{tpu_custom_call.1} parent=1 // pred_check
      _
    $region23: #{tpu_custom_call.1} parent=1 // pred_check_branch
      %24 = sbr.rel (0) target = $region25
    $region24: #{tpu_custom_call.1} parent=1 // pred_region
      _
    $region25: #{tpu_custom_call.1} parent=1 // pred_fallthru
      _
    // Predicated region
    $region26: #{tpu_custom_call.1} parent=1 // pred_check
      _
    $region27: #{tpu_custom_call.1} parent=1 // pred_check_branch
      %26 = sbr.rel (0) target = $region29
    $region28: #{tpu_custom_call.1} parent=1 // pred_region
      _
    $region29: #{tpu_custom_call.1} parent=1 // pred_fallthru
      _
    %v27 = vld [vmem:[%s0] sm:$0xff]
    %v28 = vld [vmem:[%s0 + $0x8] sm:$0xff]
    %v29 = vld [vmem:[%s1] sm:$0xff]
    %v30 = vld [vmem:[%s1 + $0x8] sm:$0xff]
    %v31 = vld [vmem:[%s1 + $0x10] sm:$0xff]
    %v32 = vld [vmem:[%s1 + $0x18] sm:$0xff]
    %vm33 = vcmask 261120
    %v35 = vsel %vm33, %v27, 0
    %v38 = vsel %vm33, %v28, 0
    %40 = vmatprep.subr.mxu0 0.0
    %41 = vmatpush1.msra.mxu0 %v29
    %42 = vmatprep.subr.mxu0 0.0
    %43 = vmatpush1.msra.mxu0 %v30
    %44 = vmatprep.subr.mxu0 0.0
    %45 = vmatpush1.msra.mxu0 %v31
    %46 = vmatprep.subr.mxu0 0.0
    %47 = vmatpush1.msra.mxu0 %v32
    %48 = vmatprep.subr.mxu0 0.0
    %49 = vmatpush1.msra.mxu0 0.0
    %50 = vmatprep.subr.mxu0 0.0
    %51 = vmatpush1.msra.mxu0 0.0
    %52 = vmatprep.subr.mxu0 0.0
    %53 = vmatpush1.msra.mxu0 0.0
    %54 = vmatprep.subr.mxu0 0.0
    %55 = vmatpush1.msra.mxu0 0.0
    %56 = vmatprep.subr.mxu0 0.0
    %57 = vmatpush1.msra.mxu0 0.0
    %58 = vmatprep.subr.mxu0 0.0
    %59 = vmatpush1.msra.mxu0 0.0
    %60 = vmatprep.subr.mxu0 0.0
    %61 = vmatpush1.msra.mxu0 0.0
    %62 = vmatprep.subr.mxu0 0.0
    %63 = vmatpush1.msra.mxu0 0.0
    %64 = vmatprep.subr.mxu0 0.0
    %65 = vmatpush1.msra.mxu0 0.0
    %66 = vmatprep.subr.mxu0 0.0
    %67 = vmatpush1.msra.mxu0 0.0
    %68 = vmatprep.subr.mxu0 0.0
    %69 = vmatpush1.msra.mxu0 0.0
    %70 = vmatprep.subr.mxu0 0.0
    %71 = vmatpush1.msra.mxu0 0.0
    %72 = vmatprep.subr.mxu0 0.0
    %73 = vmatpush1.msra.mxu0 0.0
    %74 = vmatprep.subr.mxu0 0.0
    %75 = vmatpush1.msra.mxu0 0.0
    %76 = vmatprep.subr.mxu0 0.0
    %77 = vmatpush1.msra.mxu0 0.0
    %78 = vmatprep.subr.mxu0 0.0
    %79 = vmatpush1.msra.mxu0 0.0
    %80 = vmatprep.subr.mxu0 0.0
    %81 = vmatpush1.msra.mxu0 0.0
    %82 = vmatprep.subr.mxu0 0.0
    %83 = vmatpush1.msra.mxu0 0.0
    %84 = vmatprep.subr.mxu0 0.0
    %85 = vmatpush1.msra.mxu0 0.0
    %86 = vmatprep.subr.mxu0 0.0
    %87 = vmatpush1.msra.mxu0 0.0
    %88 = vmatprep.subr.mxu0 0.0
    %89 = vmatpush1.msra.mxu0 0.0
    %90 = vmatprep.subr.mxu0 0.0
    %91 = vmatpush1.msra.mxu0 0.0
    %92 = vmatprep.subr.mxu0 0.0
    %93 = vmatpush1.msra.mxu0 0.0
    %94 = vmatprep.subr.mxu0 0.0
    %95 = vmatpush1.msra.mxu0 0.0
    %96 = vmatprep.subr.mxu0 0.0
    %97 = vmatpush1.msra.mxu0 0.0
    %98 = vmatprep.subr.mxu0 0.0
    %99 = vmatpush1.msra.mxu0 0.0
    %100 = vmatprep.subr.mxu0 0.0
    %101 = vmatpush1.msra.mxu0 0.0
    %102 = vmatprep.subr.mxu0 0.0
    %103 = vmatpush1.msra.mxu0 0.0
    %104 = vmatprep.mubr.f32.mxu0 0.0
    %105 = vmatmul.mubr.f32.gmra.mrb[0].mxu0 %v35
    %v106 = vpop.f32.mrb[0].mxu0
    %v107 = vadd.f32 0.0, %v106
    %v108 = vpop.f32.mrb[0].mxu0
    %109 = vmatprep.mubr.f32.mxu0 0.0
    %110 = vmatmul.mubr.f32.gmra.mrb[0].mxu0 %v38
    %v111 = vpop.f32.mrb[0].mxu0
    %v112 = vadd.f32 0.0, %v111
    %v113 = vpop.f32.mrb[0].mxu0
    %114 = vdwg.mxu0
    %v115 = vsel %vm33, %v27, 0.0
    %116 = vadd.xlane.f32.xlu0 %v115
    %v117 = vpop.xlane.xlu0 %116
    %v118 = vsel %vm33, %v28, 0.0
    %119 = vadd.xlane.f32.xlu0 %v118
    %v120 = vpop.xlane.xlu0 %119
    %v121 = vmul.f32 %v27, %v27
    %v122 = vmul.f32 %v28, %v28
    %v123 = vsel %vm33, %v121, 0.0
    %124 = vadd.xlane.f32.xlu0 %v123
    %v125 = vpop.xlane.xlu0 %124
    %v126 = vsel %vm33, %v122, 0.0
    %127 = vadd.xlane.f32.xlu0 %v126
    %v128 = vpop.xlane.xlu0 %127
    %v129 = vmul.f32 %v117, 0.03125
    %v130 = vmul.f32 %v120, 0.03125
    %v131 = vmul.f32 %v125, 0.03125
    %v132 = vmul.f32 %v128, 0.03125
    %v133 = vmul.f32 %v129, %v129
    %v134 = vmul.f32 %v130, %v130
    %v135 = vsub.f32 %v131, %v133
    %v136 = vsub.f32 %v132, %v134
    %v137 = vadd.f32 %v135, 1e-05
    %v138 = vadd.f32 %v136, 1e-05
    %v139 = vrsqrt.pop %v137
    %v140 = vrsqrt.pop %v138
    %v141 = vmul.f32 %v139, %v107
    %v142 = vmul.f32 %v140, %v112
    %v143 = vmul.f32 %v139, %v129
    %v144 = vmul.f32 %v140, %v130
    %v145 = vld [vmem:[%s2] sm:$0x1]
    %v147 = vlaneseq
    %v148 = vshrl.u32 %v147, 7
    %v149 = vsub.s32 0, %v148
    %v150 = vrot.slane %v145, %v149
    %v152 = vmul.f32 %v143, %v150
    %v153 = vmul.f32 %v144, %v150
    %v154 = vsub.f32 %v141, %v152
    %v155 = vsub.f32 %v142, %v153
    %v156 = vld [vmem:[%s3] sm:$0x1]
    %v158 = vlaneseq
    %v159 = vshrl.u32 %v158, 7
    %v160 = vsub.s32 0, %v159
    %v161 = vrot.slane %v156, %v160
    %v163 = vadd.f32 %v154, %v161
    %v164 = vadd.f32 %v155, %v161
    %v165 = vmax.f32 %v163, 0.0
    %v166 = vmax.f32 %v164, 0.0
    %v167 = vld [vmem:[%s4] sm:$0xff]
    %v168 = vld [vmem:[%s4 + $0x8] sm:$0xff]
    %v169 = vld [vmem:[%s4 + $0x10] sm:$0xff]
    %v170 = vld [vmem:[%s4 + $0x18] sm:$0xff]
    %v171 = vld [vmem:[%s4 + $0x20] sm:$0xff]
    %v172 = vld [vmem:[%s4 + $0x28] sm:$0xff]
    %v173 = vld [vmem:[%s4 + $0x30] sm:$0xff]
    %v174 = vld [vmem:[%s4 + $0x38] sm:$0xff]
    %v175 = vld [vmem:[%s4 + $0x40] sm:$0xff]
    %v176 = vld [vmem:[%s4 + $0x48] sm:$0xff]
    %v177 = vld [vmem:[%s4 + $0x50] sm:$0xff]
    %v178 = vld [vmem:[%s4 + $0x58] sm:$0xff]
    %v179 = vld [vmem:[%s4 + $0x60] sm:$0xff]
    %v180 = vld [vmem:[%s4 + $0x68] sm:$0xff]
    %v181 = vld [vmem:[%s4 + $0x70] sm:$0xff]
    %v182 = vld [vmem:[%s4 + $0x78] sm:$0xff]
    %183 = vmatprep.subr.mxu0 0.0
    %184 = vmatpush1.msra.mxu0 %v167
    %185 = vmatprep.subr.mxu0 0.0
    %186 = vmatpush1.msra.mxu0 %v168
    %187 = vmatprep.subr.mxu0 0.0
    %188 = vmatpush1.msra.mxu0 %v169
    %189 = vmatprep.subr.mxu0 0.0
    %190 = vmatpush1.msra.mxu0 %v170
    %191 = vmatprep.subr.mxu0 0.0
    %192 = vmatpush1.msra.mxu0 %v171
    %193 = vmatprep.subr.mxu0 0.0
    %194 = vmatpush1.msra.mxu0 %v172
    %195 = vmatprep.subr.mxu0 0.0
    %196 = vmatpush1.msra.mxu0 %v173
    %197 = vmatprep.subr.mxu0 0.0
    %198 = vmatpush1.msra.mxu0 %v174
    %199 = vmatprep.subr.mxu0 0.0
    %200 = vmatpush1.msra.mxu0 %v175
    %201 = vmatprep.subr.mxu0 0.0
    %202 = vmatpush1.msra.mxu0 %v176
    %203 = vmatprep.subr.mxu0 0.0
    %204 = vmatpush1.msra.mxu0 %v177
    %205 = vmatprep.subr.mxu0 0.0
    %206 = vmatpush1.msra.mxu0 %v178
    %207 = vmatprep.subr.mxu0 0.0
    %208 = vmatpush1.msra.mxu0 %v179
    %209 = vmatprep.subr.mxu0 0.0
    %210 = vmatpush1.msra.mxu0 %v180
    %211 = vmatprep.subr.mxu0 0.0
    %212 = vmatpush1.msra.mxu0 %v181
    %213 = vmatprep.subr.mxu0 0.0
    %214 = vmatpush1.msra.mxu0 %v182
    %215 = vmatprep.subr.mxu0 0.0
    %216 = vmatpush1.msra.mxu0 0.0
    %217 = vmatprep.subr.mxu0 0.0
    %218 = vmatpush1.msra.mxu0 0.0
    %219 = vmatprep.subr.mxu0 0.0
    %220 = vmatpush1.msra.mxu0 0.0
    %221 = vmatprep.subr.mxu0 0.0
    %222 = vmatpush1.msra.mxu0 0.0
    %223 = vmatprep.subr.mxu0 0.0
    %224 = vmatpush1.msra.mxu0 0.0
    %225 = vmatprep.subr.mxu0 0.0
    %226 = vmatpush1.msra.mxu0 0.0
    %227 = vmatprep.subr.mxu0 0.0
    %228 = vmatpush1.msra.mxu0 0.0
    %229 = vmatprep.subr.mxu0 0.0
    %230 = vmatpush1.msra.mxu0 0.0
    %231 = vmatprep.subr.mxu0 0.0
    %232 = vmatpush1.msra.mxu0 0.0
    %233 = vmatprep.subr.mxu0 0.0
    %234 = vmatpush1.msra.mxu0 0.0
    %235 = vmatprep.subr.mxu0 0.0
    %236 = vmatpush1.msra.mxu0 0.0
    %237 = vmatprep.subr.mxu0 0.0
    %238 = vmatpush1.msra.mxu0 0.0
    %239 = vmatprep.subr.mxu0 0.0
    %240 = vmatpush1.msra.mxu0 0.0
    %241 = vmatprep.subr.mxu0 0.0
    %242 = vmatpush1.msra.mxu0 0.0
    %243 = vmatprep.subr.mxu0 0.0
    %244 = vmatpush1.msra.mxu0 0.0
    %245 = vmatprep.subr.mxu0 0.0
    %246 = vmatpush1.msra.mxu0 0.0
    %247 = vmatprep.mubr.f32.mxu0 0.0
    %248 = vmatmul.mubr.f32.gmra.mrb[0].mxu0 %v165
    %v249 = vpop.f32.mrb[0].mxu0
    %v250 = vadd.f32 0.0, %v249
    %v251 = vpop.f32.mrb[0].mxu0
    %252 = vmatprep.mubr.f32.mxu0 0.0
    %253 = vmatmul.mubr.f32.gmra.mrb[0].mxu0 %v166
    %v254 = vpop.f32.mrb[0].mxu0
    %v255 = vadd.f32 0.0, %v254
    %v256 = vpop.f32.mrb[0].mxu0
    %257 = vdwg.mxu0
    %v258 = vsel %vm33, %v250, 0.0
    %259 = vadd.xlane.f32.xlu0 %v258
    %v260 = vpop.xlane.xlu0 %259
    %v261 = vsel %vm33, %v255, 0.0
    %262 = vadd.xlane.f32.xlu0 %v261
    %v263 = vpop.xlane.xlu0 %262
    %v264 = vmul.f32 %v250, %v250
    %v265 = vmul.f32 %v255, %v255
    %v266 = vsel %vm33, %v264, 0.0
    %267 = vadd.xlane.f32.xlu0 %v266
    %v268 = vpop.xlane.xlu0 %267
    %v269 = vsel %vm33, %v265, 0.0
    %270 = vadd.xlane.f32.xlu0 %v269
    %v271 = vpop.xlane.xlu0 %270
    %v272 = vmul.f32 %v260, 0.03125
    %v273 = vmul.f32 %v263, 0.03125
    %v274 = vmul.f32 %v268, 0.03125
    %v275 = vmul.f32 %v271, 0.03125
    %v276 = vmul.f32 %v272, %v272
    %v277 = vmul.f32 %v273, %v273
    %v278 = vsub.f32 %v274, %v276
    %v279 = vsub.f32 %v275, %v277
    %v280 = vsub.f32 %v250, %v272
    %v281 = vsub.f32 %v255, %v273
    %v282 = vadd.f32 %v278, 1e-05
    %v283 = vadd.f32 %v279, 1e-05
    %v284 = vrsqrt.pop %v282
    %v285 = vrsqrt.pop %v283
    %v286 = vmul.f32 %v280, %v284
    %v287 = vmul.f32 %v281, %v285
    %v288 = vld [vmem:[%s5] sm:$0x1]
    %v290 = vlaneseq
    %v291 = vshrl.u32 %v290, 7
    %v292 = vsub.s32 0, %v291
    %v293 = vrot.slane %v288, %v292
    %v295 = vmul.f32 %v286, %v293
    %v296 = vmul.f32 %v287, %v293
    %v297 = vld [vmem:[%s6] sm:$0x1]
    %v299 = vlaneseq
    %v300 = vshrl.u32 %v299, 7
    %v301 = vsub.s32 0, %v300
    %v302 = vrot.slane %v297, %v301
    %v304 = vadd.f32 %v295, %v302
    %v305 = vadd.f32 %v296, %v302
    %306 = vst.msk [vmem:[#allocation2] sm:$0xff] %vm33, %v304
    %307 = vst.msk [vmem:[#allocation2 + $0x8] sm:$0xff] %vm33, %v305
    // Predicated region
    $region30: #{tpu_custom_call.1} parent=1 // pred_check
      _
    $region31: #{tpu_custom_call.1} parent=1 // pred_check_branch
      %309 = sbr.rel (0) target = $region33
    $region32: #{tpu_custom_call.1} parent=1 // pred_region
      %s311 = ssub.s32 256, 256
      %312 = vsyncadd [#allocation3], %s311
      %s313 = sshll.u32 [#allocation2], 4
      %s314 = int_to_ptr.vmem [resolvable:$true] %s313
      %319 = dma.vmem_to_hbm [thread:$0]  %s314, 256, %s7, [#allocation3], 128, 128, 8
    $region33: #{tpu_custom_call.1} parent=1 // pred_fallthru
      _
    // Predicated region
    $region34: #{tpu_custom_call.1} parent=1 // pred_check
      _
    $region35: #{tpu_custom_call.1} parent=1 // pred_check_branch
      %321 = sbr.rel (0) target = $region37
    $region36: #{tpu_custom_call.1} parent=1 // pred_region
      %322 = dma.done [#allocation3], 256
    $region37: #{tpu_custom_call.1} parent=1 // pred_fallthru
      _
    %323 = vsyncpa [#allocation3], 1

</llo_original>
